<compile_context>
chip_gen: v6e
topology: v6e:2x2x1
jax: 0.10.0
libtpu: 0.0.40
codegen_flags: <defaults>
</compile_context>

<pallas_src>
import jax
import jax.numpy as jnp
from jax import lax
from jax.experimental import pallas as pl
from jax.experimental.pallas import tpu as pltpu


def _round_up(n, m):
    return ((n + m - 1) // m) * m


def _choose_tile(B, block_b):
    """Lane tile for the batch axis: must be a multiple of 128 OR equal to the full B."""
    if B <= 256:
        return B                                   # single full-array block (lane dim == B)
    n_blocks = max(2, pl.cdiv(B, block_b))         # >=2 grid steps so both v7x TCs get work
    return _round_up(pl.cdiv(B, n_blocks), 128)


def _pack_params(params, alpha):
    """Pack (w1x, w1o, b1, w2, b2, w3, b3) into 3 per-layer [W | b] f32 arrays, |alpha| folded."""
    w1x, w1o, b1, w2, b2, w3, b3 = params          # weights [out, in] (torch layout), biases [out]
    a = jnp.abs(alpha).astype(jnp.float32)
    l1 = jnp.concatenate([w1x, w1o, b1[:, None]], axis=1).astype(jnp.float32)      # [H1, Dx+Dout+1]
    l2 = jnp.concatenate([w2, b2[:, None]], axis=1).astype(jnp.float32)            # [H2, H1+1]
    l3 = jnp.concatenate([a * w3, (a * b3)[:, None]], axis=1).astype(jnp.float32)  # [Dout, H2+1]
    return l1, l2, l3


def _residual(x, out, l1_ref, l2_ref, l3_ref):
    """|alpha|*MLP(cat[x; out]) in [feature, batch] layout. x: [Dx, TB], out: [Dout, TB]."""
    f32 = jnp.float32
    Dx, Dout = x.shape[0], out.shape[0]
    H1, H2 = l1_ref.shape[0], l2_ref.shape[0]
    x = x.astype(f32)
    out = out.astype(f32)
    # Layer 1: split matmul == matmul against cat([x; out]) along the feature (sublane) axis.
    h = jnp.dot(l1_ref[:, :Dx], x, preferred_element_type=f32)
    h = h + jnp.dot(l1_ref[:, Dx:Dx + Dout], out, preferred_element_type=f32)
    h = jnp.tanh(h + l1_ref[:, Dx + Dout:])                      # bias [H1,1] broadcasts on lanes
    # Layer 2
    h = jnp.tanh(jnp.dot(l2_ref[:, :H1], h, preferred_element_type=f32) + l2_ref[:, H1:])
    # Layer 3 (|alpha| already folded in)
    return jnp.dot(l3_ref[:, :H2], h, preferred_element_type=f32) + l3_ref[:, H2:]


def _resblock_kernel(x_ref, out_old_ref, l1_ref, l2_ref, l3_ref, out_ref):
    out_old = out_old_ref[...].astype(jnp.float32)
    res = _residual(x_ref[...], out_old, l1_ref, l2_ref, l3_ref)
    out_ref[...] = (out_old + res).astype(out_ref.dtype)


def _resblock_multistep_kernel(x_seq_ref, out0_ref, l1_ref, l2_ref, l3_ref, out_ref):
    n_steps = x_seq_ref.shape[0]

    def step(t, out):
        return out + _residual(x_seq_ref[t], out, l1_ref, l2_ref, l3_ref)

    out = lax.fori_loop(0, n_steps, step, out0_ref[...].astype(jnp.float32))
    out_ref[...] = out.astype(out_ref.dtype)


def resnet_block_db(x_t, out_old_t, alpha, params, *, block_b=8192, act_dtype=jnp.float32):
    """Lane-dense forward.  x_t: [Dx, B], out_old_t: [Dout, B]  ->  out_new: [Dout, B].

    For a genuine in-place update of the solver state, the caller should donate out_old_t
    (jax.jit donate_argnums / dead-after-use); otherwise XLA inserts a defensive copy for
    the aliased buffer.  Use act_dtype=jnp.bfloat16 on v6e/v7x for the large-B regime.
    """
    Dx, B = x_t.shape
    Dout, B2 = out_old_t.shape
    assert B == B2
    l1, l2, l3 = _pack_params(params, alpha)
    H1, H2 = l1.shape[0], l2.shape[0]

    tb = _choose_tile(B, block_b)
    grid = (pl.cdiv(B, tb),)

    act = lambda d: pl.BlockSpec((d, tb), lambda i: (0, i))
    const = lambda arr: pl.BlockSpec(arr.shape, lambda i: (0, 0))

    itemsize = jnp.dtype(act_dtype).itemsize
    flops = 2 * B * ((Dx + Dout) * H1 + H1 * H2 + H2 * Dout)
    transcendentals = B * (H1 + H2)
    bytes_accessed = itemsize * B * (Dx + 2 * Dout) + 4 * (l1.size + l2.size + l3.size)

    return pl.pallas_call(
        _resblock_kernel,
        out_shape=jax.ShapeDtypeStruct((Dout, B), act_dtype),
        grid=grid,
        in_specs=[act(Dx), act(Dout), const(l1), const(l2), const(l3)],
        out_specs=act(Dout),
        input_output_aliases={1: 0},                       # out_old -> out (in-place when donated)
        compiler_params=pltpu.CompilerParams(
            dimension_semantics=("parallel",)),            # megacore sharding on v7x
        cost_estimate=pl.CostEstimate(flops=flops, transcendentals=transcendentals,
                                      bytes_accessed=bytes_accessed),
    )(x_t.astype(act_dtype), out_old_t.astype(act_dtype), l1, l2, l3)


def resnet_block_multistep_db(x_seq_t, out0_t, alpha, params, *, block_b=8192,
                              act_dtype=jnp.float32, vmem_budget_bytes=16 << 20):
    """Fused N-step recurrence: out_{t+1} = out_t + |alpha| * MLP(cat[x_t; out_t]).

    x_seq_t: [T, Dx, B], out0_t: [Dout, B]  ->  out_T: [Dout, B].  Weights stay resident in
    VMEM and `out` is carried on-chip across steps; only out0 is read and out_T written.
    """
    T, Dx, B = x_seq_t.shape
    Dout, B2 = out0_t.shape
    assert B == B2
    l1, l2, l3 = _pack_params(params, alpha)
    H1, H2 = l1.shape[0], l2.shape[0]

    itemsize = jnp.dtype(act_dtype).itemsize
    # Keep the double-buffered x-sequence tile under a conservative VMEM budget
    # (v7x has only 64 MiB physical / 32 MiB scoped VMEM per TensorCore).
    max_lanes = max(128, (vmem_budget_bytes // (2 * T * Dx * itemsize)) // 128 * 128)
    tb = _choose_tile(B, min(block_b, max_lanes))
    grid = (pl.cdiv(B, tb),)

    act = lambda d: pl.BlockSpec((d, tb), lambda i: (0, i))
    const = lambda arr: pl.BlockSpec(arr.shape, lambda i: (0, 0))
    xseq_spec = pl.BlockSpec((T, Dx, tb), lambda i: (0, 0, i))

    flops = 2 * T * B * ((Dx + Dout) * H1 + H1 * H2 + H2 * Dout)
    transcendentals = T * B * (H1 + H2)
    bytes_accessed = itemsize * B * (T * Dx + 2 * Dout) + 4 * (l1.size + l2.size + l3.size)

    return pl.pallas_call(
        _resblock_multistep_kernel,
        out_shape=jax.ShapeDtypeStruct((Dout, B), act_dtype),
        grid=grid,
        in_specs=[xseq_spec, act(Dout), const(l1), const(l2), const(l3)],
        out_specs=act(Dout),
        input_output_aliases={1: 0},
        compiler_params=pltpu.CompilerParams(dimension_semantics=("parallel",)),
        cost_estimate=pl.CostEstimate(flops=flops, transcendentals=transcendentals,
                                      bytes_accessed=bytes_accessed),
    )(x_seq_t.astype(act_dtype), out0_t.astype(act_dtype), l1, l2, l3)


def resnet_block(x, out_old, alpha, params, **kwargs):
    """PyTorch-interface forward: x [B, Dx], out_old [B, Dout] -> out_new [B, Dout].

    The transposes here each cost an extra HBM pass; a Godunov solver should keep its
    state in [D, B] layout permanently and call resnet_block_db / *_multistep_db directly.
    """
    return resnet_block_db(x.T, out_old.T, alpha, params, **kwargs).T


def init_params(key, in_dim_x, in_dim_out, hres_sizes=(20, 20)):
    """Deterministic synthetic init. Weights stored [out, in] (torch layout); biases [out]."""
    h1, h2 = hres_sizes
    d_in = in_dim_x + in_dim_out
    ks = jax.random.split(key, 6)
    s = 0.1
    w1 = s * jax.random.normal(ks[0], (h1, d_in), jnp.float32)
    b1 = s * jax.random.normal(ks[1], (h1,), jnp.float32)
    w2 = s * jax.random.normal(ks[2], (h2, h1), jnp.float32)
    b2 = s * jax.random.normal(ks[3], (h2,), jnp.float32)
    w3 = s * jax.random.normal(ks[4], (in_dim_out, h2), jnp.float32)
    b3 = s * jax.random.normal(ks[5], (in_dim_out,), jnp.float32)
    w1x, w1o = w1[:, :in_dim_x], w1[:, in_dim_x:]
    return (w1x, w1o, b1, w2, b2, w3, b3)


def reference(x, out_old, alpha, params):
    """Pure-JAX reference matching the PyTorch module semantics ([B, D] layout)."""
    w1x, w1o, b1, w2, b2, w3, b3 = params
    h = jnp.concatenate([x, out_old], axis=1)
    w1 = jnp.concatenate([w1x, w1o], axis=1)
    h = jnp.tanh(h @ w1.T + b1)
    h = jnp.tanh(h @ w2.T + b2)
    residual = h @ w3.T + b3
    return out_old + jnp.abs(alpha) * residual


if __name__ == "__main__":
    key = jax.random.PRNGKey(0)
    k_p, k_x, k_o, k_x2, k_o2, k_seq, k_o3 = jax.random.split(key, 7)

    in_dim_x, in_dim_out = 4, 4
    params = init_params(k_p, in_dim_x, in_dim_out, hres_sizes=(20, 20))
    alpha = jnp.float32(-0.5)   # |alpha| is applied, matching torch.abs(alpha)

    # Case 1: small batch (not a multiple of 8/128), single lane-dense block, torch interface.
    B = 20
    x = jax.random.normal(k_x, (B, in_dim_x), jnp.float32)
    out_old = jax.random.normal(k_o, (B, in_dim_out), jnp.float32)
    out_new = jax.block_until_ready(resnet_block(x, out_old, alpha, params))
    ref = reference(x, out_old, alpha, params)
    assert out_new.shape == (B, in_dim_out)
    assert jnp.allclose(out_new, ref, atol=2e-5, rtol=1e-5)

    # Case 2: multi-block grid with a masked partial last block (B=300 -> 2 blocks of 256),
    # native [D, B] layout (no transposes, no padding, resident weights across grid steps).
    B2 = 300
    x2_t = jax.random.normal(k_x2, (in_dim_x, B2), jnp.float32)
    out_old2_t = jax.random.normal(k_o2, (in_dim_out, B2), jnp.float32)
    out_new2_t = jax.block_until_ready(
        resnet_block_db(x2_t, out_old2_t, alpha, params, block_b=256))
    ref2 = reference(x2_t.T, out_old2_t.T, alpha, params)
    assert out_new2_t.shape == (in_dim_out, B2)
    assert jnp.allclose(out_new2_t.T, ref2, atol=2e-5, rtol=1e-5)

    # Case 3: fused multi-time-step recurrence (weights resident, out carried on-chip).
    T, B3 = 3, 40
    x_seq_t = jax.random.normal(k_seq, (T, in_dim_x, B3), jnp.float32)
    out0_t = jax.random.normal(k_o3, (in_dim_out, B3), jnp.float32)
    out_T_t = jax.block_until_ready(
        resnet_block_multistep_db(x_seq_t, out0_t, alpha, params))
    ref_out = out0_t.T
    for t in range(T):
        ref_out = reference(x_seq_t[t].T, ref_out, alpha, params)
    assert out_T_t.shape == (in_dim_out, B3)
    assert jnp.allclose(out_T_t.T, ref_out, atol=5e-5, rtol=1e-5)

    print("KERNEL_OK")
</pallas_src>

<mosaic_0001>
module attributes {stable_mosaic.version = 11 : i64} {
  func.func @_resblock_kernel(%arg0: i32, %arg1: memref<4x20xf32, #tpu.memory_space<vmem>>, %arg2: memref<4x20xf32, #tpu.memory_space<vmem>>, %arg3: memref<20x9xf32, #tpu.memory_space<vmem>>, %arg4: memref<20x21xf32, #tpu.memory_space<vmem>>, %arg5: memref<4x21xf32, #tpu.memory_space<vmem>>, %arg6: memref<4x20xf32, #tpu.memory_space<vmem>>) attributes {dimension_semantics = [#tpu.dimension_semantics<parallel>], iteration_bounds = array<i64: 1>, scalar_prefetch = 0 : i64, scratch_operands = 0 : i64, tpu.core_type = #tpu.core_type<tc>, window_params = [{transform_indices = @transform_0, window_bounds = array<i64: 4, 20>}, {transform_indices = @transform_1, window_bounds = array<i64: 4, 20>}, {pipeline_mode = #tpu.pipeline_mode<synchronous>, transform_indices = @transform_2, window_bounds = array<i64: 20, 9>}, {pipeline_mode = #tpu.pipeline_mode<synchronous>, transform_indices = @transform_3, window_bounds = array<i64: 20, 21>}, {pipeline_mode = #tpu.pipeline_mode<synchronous>, transform_indices = @transform_4, window_bounds = array<i64: 4, 21>}, {transform_indices = @transform_5, window_bounds = array<i64: 4, 20>}]} {
    %c0 = arith.constant 0 : index
    %c0_0 = arith.constant 0 : index
    %0 = vector.load %arg2[%c0, %c0_0] : memref<4x20xf32, #tpu.memory_space<vmem>>, vector<4x20xf32>
    %c0_1 = arith.constant 0 : index
    %c0_2 = arith.constant 0 : index
    %1 = vector.load %arg1[%c0_1, %c0_2] : memref<4x20xf32, #tpu.memory_space<vmem>>, vector<4x20xf32>
    %c0_3 = arith.constant 0 : index
    %c0_4 = arith.constant 0 : index
    %2 = vector.load %arg3[%c0_3, %c0_4] : memref<20x9xf32, #tpu.memory_space<vmem>>, vector<20x4xf32>
    %cst = arith.constant dense<0.000000e+00> : vector<20x20xf32>
    %3 = tpu.matmul %2, %1, %cst {dimension_numbers = #tpu.dot_dimension_numbers<[1], [0], [0], [1], [0, 0, 1, 1], [], []>} : vector<20x4xf32>, vector<4x20xf32>, vector<20x20xf32> -> vector<20x20xf32>
    %c0_5 = arith.constant 0 : index
    %c4 = arith.constant 4 : index
    %4 = vector.load %arg3[%c0_5, %c4] : memref<20x9xf32, #tpu.memory_space<vmem>>, vector<20x4xf32>
    %cst_6 = arith.constant dense<0.000000e+00> : vector<20x20xf32>
    %5 = tpu.matmul %4, %0, %cst_6 {dimension_numbers = #tpu.dot_dimension_numbers<[1], [0], [0], [1], [0, 0, 1, 1], [], []>} : vector<20x4xf32>, vector<4x20xf32>, vector<20x20xf32> -> vector<20x20xf32>
    %6 = arith.addf %3, %5 : vector<20x20xf32>
    %c0_7 = arith.constant 0 : index
    %c8 = arith.constant 8 : index
    %7 = vector.load %arg3[%c0_7, %c8] : memref<20x9xf32, #tpu.memory_space<vmem>>, vector<20x1xf32>
    %8 = vector.broadcast %7 : vector<20x1xf32> to vector<20x20xf32>
    %9 = arith.addf %6, %8 : vector<20x20xf32>
    %10 = math.tanh %9 : vector<20x20xf32>
    %c0_8 = arith.constant 0 : index
    %c0_9 = arith.constant 0 : index
    %11 = vector.load %arg4[%c0_8, %c0_9] : memref<20x21xf32, #tpu.memory_space<vmem>>, vector<20x20xf32>
    %cst_10 = arith.constant dense<0.000000e+00> : vector<20x20xf32>
    %12 = tpu.matmul %11, %10, %cst_10 {dimension_numbers = #tpu.dot_dimension_numbers<[1], [0], [0], [1], [0, 0, 1, 1], [], []>} : vector<20x20xf32>, vector<20x20xf32>, vector<20x20xf32> -> vector<20x20xf32>
    %c0_11 = arith.constant 0 : index
    %c20 = arith.constant 20 : index
    %13 = vector.load %arg4[%c0_11, %c20] : memref<20x21xf32, #tpu.memory_space<vmem>>, vector<20x1xf32>
    %14 = vector.broadcast %13 : vector<20x1xf32> to vector<20x20xf32>
    %15 = arith.addf %12, %14 : vector<20x20xf32>
    %16 = math.tanh %15 : vector<20x20xf32>
    %c0_12 = arith.constant 0 : index
    %c0_13 = arith.constant 0 : index
    %17 = vector.load %arg5[%c0_12, %c0_13] : memref<4x21xf32, #tpu.memory_space<vmem>>, vector<4x20xf32>
    %cst_14 = arith.constant dense<0.000000e+00> : vector<4x20xf32>
    %18 = tpu.matmul %17, %16, %cst_14 {dimension_numbers = #tpu.dot_dimension_numbers<[1], [0], [0], [1], [0, 0, 1, 1], [], []>} : vector<4x20xf32>, vector<20x20xf32>, vector<4x20xf32> -> vector<4x20xf32>
    %c0_15 = arith.constant 0 : index
    %c20_16 = arith.constant 20 : index
    %19 = vector.load %arg5[%c0_15, %c20_16] : memref<4x21xf32, #tpu.memory_space<vmem>>, vector<4x1xf32>
    %20 = vector.broadcast %19 : vector<4x1xf32> to vector<4x20xf32>
    %21 = arith.addf %18, %20 : vector<4x20xf32>
    %22 = arith.addf %0, %21 : vector<4x20xf32>
    %c0_17 = arith.constant 0 : index
    %c0_18 = arith.constant 0 : index
    %23 = vector.load %arg6[%c0_17, %c0_18] : memref<4x20xf32, #tpu.memory_space<vmem>>, vector<4x20xf32>
    tpu.vector_store %arg6[%c0_17, %c0_18], %22 {strides = array<i32>} : memref<4x20xf32, #tpu.memory_space<vmem>>, vector<4x20xf32>,
    return
  }
  func.func @transform_0(%arg0: i32) -> (i32, i32) {
    %c0_i32 = arith.constant 0 : i32
    %c0_i32_0 = arith.constant 0 : i32
    return %c0_i32, %arg0 : i32, i32
  }
  func.func @transform_1(%arg0: i32) -> (i32, i32) {
    %c0_i32 = arith.constant 0 : i32
    %c0_i32_0 = arith.constant 0 : i32
    return %c0_i32, %arg0 : i32, i32
  }
  func.func @transform_2(%arg0: i32) -> (i32, i32) {
    %c0_i32 = arith.constant 0 : i32
    %c0_i32_0 = arith.constant 0 : i32
    %c0_i32_1 = arith.constant 0 : i32
    return %c0_i32, %c0_i32_0 : i32, i32
  }
  func.func @transform_3(%arg0: i32) -> (i32, i32) {
    %c0_i32 = arith.constant 0 : i32
    %c0_i32_0 = arith.constant 0 : i32
    %c0_i32_1 = arith.constant 0 : i32
    return %c0_i32, %c0_i32_0 : i32, i32
  }
  func.func @transform_4(%arg0: i32) -> (i32, i32) {
    %c0_i32 = arith.constant 0 : i32
    %c0_i32_0 = arith.constant 0 : i32
    %c0_i32_1 = arith.constant 0 : i32
    return %c0_i32, %c0_i32_0 : i32, i32
  }
  func.func @transform_5(%arg0: i32) -> (i32, i32) {
    %c0_i32 = arith.constant 0 : i32
    %c0_i32_0 = arith.constant 0 : i32
    return %c0_i32, %arg0 : i32, i32
  }
}

</mosaic_0001>

<llo_original>
// kernel: tpu_custom_call.1
$region0: #{tpu_custom_call.1}
  #allocation0 [shape = 'u32[]', space=smem, size = 0x4, offset = 0x4, fixed_abs, tag = 'smem constant byte address 0x4 - core index']
  #allocation1 [shape = 'u32[144,128]{1,0:T(1,128)}', space=vmem, size = 0x12000, scoped, tag = 'internal scratch']
  %s0 = inlined_call_operand.vmem [shape: f32[4,20], index: 0, kind: input, shape index: {}]
  %s1 = inlined_call_operand.hbm [shape: f32[4,20], index: 1, kind: input, shape index: {}, may-alias: {1,5}]
  %s2 = inlined_call_operand.vmem [shape: f32[20,9], index: 2, kind: input, shape index: {}]
  %s3 = inlined_call_operand.vmem [shape: f32[20,21], index: 3, kind: input, shape index: {}]
  %s4 = inlined_call_operand.vmem [shape: f32[4,21], index: 4, kind: input, shape index: {}]
  %s5 = inlined_call_operand.hbm [shape: f32[4,20], index: 5, kind: output, shape index: {}, may-alias: {1,5}]
  %s6 = sld [smem:[#allocation0]]
  $region34: #{tpu_custom_call.1} parent=0
    _
  %s8 = ssub.s32 1, %s6
  %s9 = scalar_select 0, %s8, %s6
  $region1: #{tpu_custom_call.1} parent=0
    #allocation2 [shape = 'u8[2048]{0}', space=vmem, size = 0x800, scoped, tag = 'input window, operand 1, single buffered']
    #allocation3 [shape = 's32[1]{0}', space=sflag, size = 0x4, scoped, tag = 'scoped memory for tpu_custom_call.1']
    #allocation4 [shape = 's32[1]{0}', space=sflag, size = 0x4, scoped, tag = 'scoped memory for tpu_custom_call.1']
    #allocation5 [shape = 'u8[2048]{0}', space=vmem, size = 0x800, scoped, tag = 'output window, operand 0, single buffered']
    %10 = vsyncpa [#allocation3], 0
    %11 = vsyncpa [#allocation4], 0
    // Predicated region
    $region2: #{tpu_custom_call.1} parent=1 // pred_check
      _
    $region3: #{tpu_custom_call.1} parent=1 // pred_check_branch
      %13 = sbr.rel (0) target = $region5
    $region4: #{tpu_custom_call.1} parent=1 // pred_region
      _
    $region5: #{tpu_custom_call.1} parent=1 // pred_fallthru
      _
    // Predicated region
    $region6: #{tpu_custom_call.1} parent=1 // pred_check
      _
    $region7: #{tpu_custom_call.1} parent=1 // pred_check_branch
      %15 = sbr.rel (0) target = $region9
    $region8: #{tpu_custom_call.1} parent=1 // pred_region
      %s17 = ssub.s32 64, 64
      %18 = vsyncadd [#allocation3], %s17
      %s20 = sshll.u32 [#allocation2], 4
      %s21 = int_to_ptr.vmem [resolvable:$true] %s20
      %23 = dma.hbm_to_vmem [thread:$0]  %s1, 64, %s21, [#allocation3]
    $region9: #{tpu_custom_call.1} parent=1 // pred_fallthru
      _
    // Predicated region
    $region10: #{tpu_custom_call.1} parent=1 // pred_check
      _
    $region11: #{tpu_custom_call.1} parent=1 // pred_check_branch
      %25 = sbr.rel (0) target = $region13
    $region12: #{tpu_custom_call.1} parent=1 // pred_region
      _
    $region13: #{tpu_custom_call.1} parent=1 // pred_fallthru
      _
    // Predicated region
    $region14: #{tpu_custom_call.1} parent=1 // pred_check
      _
    $region15: #{tpu_custom_call.1} parent=1 // pred_check_branch
      %27 = sbr.rel (0) target = $region17
    $region16: #{tpu_custom_call.1} parent=1 // pred_region
      _
    $region17: #{tpu_custom_call.1} parent=1 // pred_fallthru
      _
    // Predicated region
    $region18: #{tpu_custom_call.1} parent=1 // pred_check
      _
    $region19: #{tpu_custom_call.1} parent=1 // pred_check_branch
      %29 = sbr.rel (0) target = $region21
    $region20: #{tpu_custom_call.1} parent=1 // pred_region
      _
    $region21: #{tpu_custom_call.1} parent=1 // pred_fallthru
      _
    // Predicated region
    $region22: #{tpu_custom_call.1} parent=1 // pred_check
      _
    $region23: #{tpu_custom_call.1} parent=1 // pred_check_branch
      %31 = sbr.rel (0) target = $region25
    $region24: #{tpu_custom_call.1} parent=1 // pred_region
      %32 = dma.done [#allocation3], 64
    $region25: #{tpu_custom_call.1} parent=1 // pred_fallthru
      _
    %v33 = vld [vmem:[#allocation2] sm:$0xf]
    %v34 = vld [vmem:[%s0] sm:$0xf]
    %v35 = vld [vmem:[%s2] sm:$0xff]
    %v36 = vld [vmem:[%s2 + $0x8] sm:$0xff]
    %v37 = vld [vmem:[%s2 + $0x10] sm:$0xf]
    %41 = vrot.lane.b32.xlu0 %v35, 124
    %v42 = vpop.permute.xlu0 %41
    %43 = vrot.lane.b32.xlu0 %v36, 124
    %v44 = vpop.permute.xlu0 %43
    %45 = vrot.lane.b32.xlu0 %v37, 124
    %v46 = vpop.permute.xlu0 %45
    %vm47 = vcmask 31744
    %v48 = vsel %vm47, %v42, 0
    %v50 = vsel %vm47, %v44, 0
    %v52 = vsel %vm47, %v46, 0
    %vm54 = vcmask 1043456
    %v56 = vsel %vm54, %v33, 0
    %58 = vmatprep.subr.mxu0 0.0
    %59 = vmatpush1.msra.mxu0 0.0
    %60 = vmatprep.subr.mxu0 0.0
    %61 = vmatpush1.msra.mxu0 0.0
    %62 = vmatprep.subr.mxu0 0.0
    %63 = vmatpush1.msra.mxu0 0.0
    %64 = vmatprep.subr.mxu0 0.0
    %65 = vmatpush1.msra.mxu0 0.0
    %66 = vmatprep.subr.mxu0 0.0
    %67 = vmatpush1.msra.mxu0 0.0
    %68 = vmatprep.subr.mxu0 0.0
    %69 = vmatpush1.msra.mxu0 0.0
    %70 = vmatprep.subr.mxu0 0.0
    %71 = vmatpush1.msra.mxu0 0.0
    %72 = vmatprep.subr.mxu0 0.0
    %73 = vmatpush1.msra.mxu0 0.0
    %74 = vmatprep.subr.mxu0 0.0
    %75 = vmatpush1.msra.mxu0 0.0
    %76 = vmatprep.subr.mxu0 0.0
    %77 = vmatpush1.msra.mxu0 0.0
    %78 = vmatprep.subr.mxu0 0.0
    %79 = vmatpush1.msra.mxu0 0.0
    %80 = vmatprep.subr.mxu0 0.0
    %81 = vmatpush1.msra.mxu0 0.0
    %82 = vmatprep.subr.mxu0 0.0
    %83 = vmatpush1.msra.mxu0 0.0
    %84 = vmatprep.subr.mxu0 0.0
    %85 = vmatpush1.msra.mxu0 0.0
    %86 = vmatprep.subr.mxu0 0.0
    %87 = vmatpush1.msra.mxu0 0.0
    %88 = vmatprep.subr.mxu0 0.0
    %89 = vmatpush1.msra.mxu0 %v56
    %90 = vmatprep.subr.mxu0 0.0
    %91 = vmatpush2.msra.mxu0 0.0
    %92 = vmatprep.subr.mxu0 0.0
    %93 = vmatpush2.msra.mxu0 0.0
    %94 = vmatprep.subr.mxu0 0.0
    %95 = vmatpush2.msra.mxu0 0.0
    %96 = vmatprep.subr.mxu0 0.0
    %97 = vmatpush2.msra.mxu0 0.0
    %98 = vmatprep.subr.mxu0 0.0
    %99 = vmatpush2.msra.mxu0 0.0
    %100 = vmatprep.subr.mxu0 0.0
    %101 = vmatpush2.msra.mxu0 0.0
    %102 = vmatprep.subr.mxu0 0.0
    %103 = vmatpush2.msra.mxu0 0.0
    %104 = vmatprep.subr.mxu0 0.0
    %105 = vmatpush2.msra.mxu0 0.0
    %106 = vmatprep.subr.mxu0 0.0
    %107 = vmatpush2.msra.mxu0 0.0
    %108 = vmatprep.subr.mxu0 0.0
    %109 = vmatpush2.msra.mxu0 0.0
    %110 = vmatprep.subr.mxu0 0.0
    %111 = vmatpush2.msra.mxu0 0.0
    %112 = vmatprep.subr.mxu0 0.0
    %113 = vmatpush2.msra.mxu0 0.0
    %114 = vmatprep.subr.mxu0 0.0
    %115 = vmatpush2.msra.mxu0 0.0
    %116 = vmatprep.subr.mxu0 0.0
    %117 = vmatpush2.msra.mxu0 0.0
    %118 = vmatprep.subr.mxu0 0.0
    %119 = vmatpush2.msra.mxu0 0.0
    %120 = vmatprep.subr.mxu0 0.0
    %121 = vmatpush2.msra.mxu0 0.0
    %122 = vmatprep.mubr.f32.mxu0 0.0
    %123 = vmatmul.mubr.f32.gmra.mxu0 %v48
    %v124 = vpop.f32.mrf.mxu0
    %v125 = vadd.f32 0.0, %v124
    %v126 = vpop.f32.mrf.mxu0
    %127 = vmatprep.mubr.f32.mxu0 0.0
    %128 = vmatmul.mubr.f32.gmra.mxu0 %v50
    %v129 = vpop.f32.mrf.mxu0
    %v130 = vadd.f32 0.0, %v129
    %v131 = vpop.f32.mrf.mxu0
    %132 = vmatprep.mubr.f32.mxu0 0.0
    %133 = vmatmul.mubr.f32.gmra.mxu0 %v52
    %v134 = vpop.f32.mrf.mxu0
    %v135 = vadd.f32 0.0, %v134
    %v136 = vpop.f32.mrf.mxu0
    %137 = vdwg.mxu0
    %v138 = vsel %vm47, %v35, 0
    %v140 = vsel %vm47, %v36, 0
    %v142 = vsel %vm47, %v37, 0
    %v145 = vsel %vm54, %v34, 0
    %147 = vmatprep.subr.mxu0 0.0
    %148 = vmatpush1.msra.mxu0 0.0
    %149 = vmatprep.subr.mxu0 0.0
    %150 = vmatpush1.msra.mxu0 0.0
    %151 = vmatprep.subr.mxu0 0.0
    %152 = vmatpush1.msra.mxu0 0.0
    %153 = vmatprep.subr.mxu0 0.0
    %154 = vmatpush1.msra.mxu0 0.0
    %155 = vmatprep.subr.mxu0 0.0
    %156 = vmatpush1.msra.mxu0 0.0
    %157 = vmatprep.subr.mxu0 0.0
    %158 = vmatpush1.msra.mxu0 0.0
    %159 = vmatprep.subr.mxu0 0.0
    %160 = vmatpush1.msra.mxu0 0.0
    %161 = vmatprep.subr.mxu0 0.0
    %162 = vmatpush1.msra.mxu0 0.0
    %163 = vmatprep.subr.mxu0 0.0
    %164 = vmatpush1.msra.mxu0 0.0
    %165 = vmatprep.subr.mxu0 0.0
    %166 = vmatpush1.msra.mxu0 0.0
    %167 = vmatprep.subr.mxu0 0.0
    %168 = vmatpush1.msra.mxu0 0.0
    %169 = vmatprep.subr.mxu0 0.0
    %170 = vmatpush1.msra.mxu0 0.0
    %171 = vmatprep.subr.mxu0 0.0
    %172 = vmatpush1.msra.mxu0 0.0
    %173 = vmatprep.subr.mxu0 0.0
    %174 = vmatpush1.msra.mxu0 0.0
    %175 = vmatprep.subr.mxu0 0.0
    %176 = vmatpush1.msra.mxu0 0.0
    %177 = vmatprep.subr.mxu0 0.0
    %178 = vmatpush1.msra.mxu0 %v145
    %179 = vmatprep.subr.mxu0 0.0
    %180 = vmatpush2.msra.mxu0 0.0
    %181 = vmatprep.subr.mxu0 0.0
    %182 = vmatpush2.msra.mxu0 0.0
    %183 = vmatprep.subr.mxu0 0.0
    %184 = vmatpush2.msra.mxu0 0.0
    %185 = vmatprep.subr.mxu0 0.0
    %186 = vmatpush2.msra.mxu0 0.0
    %187 = vmatprep.subr.mxu0 0.0
    %188 = vmatpush2.msra.mxu0 0.0
    %189 = vmatprep.subr.mxu0 0.0
    %190 = vmatpush2.msra.mxu0 0.0
    %191 = vmatprep.subr.mxu0 0.0
    %192 = vmatpush2.msra.mxu0 0.0
    %193 = vmatprep.subr.mxu0 0.0
    %194 = vmatpush2.msra.mxu0 0.0
    %195 = vmatprep.subr.mxu0 0.0
    %196 = vmatpush2.msra.mxu0 0.0
    %197 = vmatprep.subr.mxu0 0.0
    %198 = vmatpush2.msra.mxu0 0.0
    %199 = vmatprep.subr.mxu0 0.0
    %200 = vmatpush2.msra.mxu0 0.0
    %201 = vmatprep.subr.mxu0 0.0
    %202 = vmatpush2.msra.mxu0 0.0
    %203 = vmatprep.subr.mxu0 0.0
    %204 = vmatpush2.msra.mxu0 0.0
    %205 = vmatprep.subr.mxu0 0.0
    %206 = vmatpush2.msra.mxu0 0.0
    %207 = vmatprep.subr.mxu0 0.0
    %208 = vmatpush2.msra.mxu0 0.0
    %209 = vmatprep.subr.mxu0 0.0
    %210 = vmatpush2.msra.mxu0 0.0
    %211 = vmatprep.mubr.f32.mxu0 0.0
    %212 = vmatmul.mubr.f32.gmra.mxu0 %v138
    %v213 = vpop.f32.mrf.mxu0
    %v214 = vadd.f32 %v125, %v213
    %v215 = vpop.f32.mrf.mxu0
    %216 = vmatprep.mubr.f32.mxu0 0.0
    %217 = vmatmul.mubr.f32.gmra.mxu0 %v140
    %v218 = vpop.f32.mrf.mxu0
    %v219 = vadd.f32 %v130, %v218
    %v220 = vpop.f32.mrf.mxu0
    %221 = vmatprep.mubr.f32.mxu0 0.0
    %222 = vmatmul.mubr.f32.gmra.mxu0 %v142
    %v223 = vpop.f32.mrf.mxu0
    %v224 = vadd.f32 %v135, %v223
    %v225 = vpop.f32.mrf.mxu0
    %226 = vdwg.mxu0
    %227 = vset.pattern.permute.xlu0 8
    %228 = vperm.xlu0 %227, %v35
    %v229 = vpop.permute.xlu0 %228
    %231 = vset.pattern.permute.xlu0 8
    %232 = vperm.xlu0 %231, %v36
    %v233 = vpop.permute.xlu0 %232
    %235 = vset.pattern.permute.xlu0 8
    %236 = vperm.xlu0 %235, %v37
    %v237 = vpop.permute.xlu0 %236
    %v239 = vadd.f32 %v214, %v229
    %v240 = vadd.f32 %v219, %v233
    %v241 = vadd.f32 %v224, %v237
    %v242 = vtanh.pop %v239
    %v243 = vtanh.pop %v240
    %v244 = vtanh.pop %v241
    %v245 = vld [vmem:[%s3] sm:$0xff]
    %v246 = vld [vmem:[%s3 + $0x8] sm:$0xff]
    %v247 = vld [vmem:[%s3 + $0x10] sm:$0xf]
    %249 = vset.pattern.permute.xlu0 20
    %250 = vperm.xlu0 %249, %v245
    %v251 = vpop.permute.xlu0 %250
    %254 = vset.pattern.permute.xlu0 20
    %255 = vperm.xlu0 %254, %v246
    %v256 = vpop.permute.xlu0 %255
    %259 = vset.pattern.permute.xlu0 20
    %260 = vperm.xlu0 %259, %v247
    %v261 = vpop.permute.xlu0 %260
    %vm263 = vcmask 162816
    %v264 = vsel %vm263, %v245, 0
    %v266 = vsel %vm263, %v246, 0
    %v268 = vsel %vm263, %v247, 0
    %v271 = vsel %vm54, %v244, 0
    %273 = vmatprep.subr.mxu0 0.0
    %274 = vmatpush1.msra.mxu0 0.0
    %275 = vmatprep.subr.mxu0 0.0
    %276 = vmatpush1.msra.mxu0 0.0
    %277 = vmatprep.subr.mxu0 0.0
    %278 = vmatpush1.msra.mxu0 0.0
    %279 = vmatprep.subr.mxu0 0.0
    %280 = vmatpush1.msra.mxu0 0.0
    %281 = vmatprep.subr.mxu0 0.0
    %282 = vmatpush1.msra.mxu0 0.0
    %283 = vmatprep.subr.mxu0 0.0
    %284 = vmatpush1.msra.mxu0 0.0
    %285 = vmatprep.subr.mxu0 0.0
    %286 = vmatpush1.msra.mxu0 0.0
    %287 = vmatprep.subr.mxu0 0.0
    %288 = vmatpush1.msra.mxu0 0.0
    %289 = vmatprep.subr.mxu0 0.0
    %290 = vmatpush1.msra.mxu0 0.0
    %291 = vmatprep.subr.mxu0 0.0
    %292 = vmatpush1.msra.mxu0 0.0
    %293 = vmatprep.subr.mxu0 0.0
    %294 = vmatpush1.msra.mxu0 0.0
    %295 = vmatprep.subr.mxu0 0.0
    %296 = vmatpush1.msra.mxu0 0.0
    %297 = vmatprep.subr.mxu0 0.0
    %298 = vmatpush1.msra.mxu0 0.0
    %299 = vmatprep.subr.mxu0 0.0
    %300 = vmatpush1.msra.mxu0 %v271
    %301 = vmatprep.subr.mxu0 0.0
    %302 = vmatpush1.msra.mxu0 %v243
    %303 = vmatprep.subr.mxu0 0.0
    %304 = vmatpush1.msra.mxu0 %v242
    %305 = vmatprep.subr.mxu0 0.0
    %306 = vmatpush2.msra.mxu0 0.0
    %307 = vmatprep.subr.mxu0 0.0
    %308 = vmatpush2.msra.mxu0 0.0
    %309 = vmatprep.subr.mxu0 0.0
    %310 = vmatpush2.msra.mxu0 0.0
    %311 = vmatprep.subr.mxu0 0.0
    %312 = vmatpush2.msra.mxu0 0.0
    %313 = vmatprep.subr.mxu0 0.0
    %314 = vmatpush2.msra.mxu0 0.0
    %315 = vmatprep.subr.mxu0 0.0
    %316 = vmatpush2.msra.mxu0 0.0
    %317 = vmatprep.subr.mxu0 0.0
    %318 = vmatpush2.msra.mxu0 0.0
    %319 = vmatprep.subr.mxu0 0.0
    %320 = vmatpush2.msra.mxu0 0.0
    %321 = vmatprep.subr.mxu0 0.0
    %322 = vmatpush2.msra.mxu0 0.0
    %323 = vmatprep.subr.mxu0 0.0
    %324 = vmatpush2.msra.mxu0 0.0
    %325 = vmatprep.subr.mxu0 0.0
    %326 = vmatpush2.msra.mxu0 0.0
    %327 = vmatprep.subr.mxu0 0.0
    %328 = vmatpush2.msra.mxu0 0.0
    %329 = vmatprep.subr.mxu0 0.0
    %330 = vmatpush2.msra.mxu0 0.0
    %331 = vmatprep.subr.mxu0 0.0
    %332 = vmatpush2.msra.mxu0 0.0
    %333 = vmatprep.subr.mxu0 0.0
    %334 = vmatpush2.msra.mxu0 0.0
    %335 = vmatprep.subr.mxu0 0.0
    %336 = vmatpush2.msra.mxu0 0.0
    %337 = vmatprep.mubr.f32.mxu0 0.0
    %338 = vmatmul.mubr.f32.gmra.mxu0 %v264
    %v339 = vpop.f32.mrf.mxu0
    %v340 = vadd.f32 %v251, %v339
    %v341 = vpop.f32.mrf.mxu0
    %342 = vmatprep.mubr.f32.mxu0 0.0
    %343 = vmatmul.mubr.f32.gmra.mxu0 %v266
    %v344 = vpop.f32.mrf.mxu0
    %v345 = vadd.f32 %v256, %v344
    %v346 = vpop.f32.mrf.mxu0
    %347 = vmatprep.mubr.f32.mxu0 0.0
    %348 = vmatmul.mubr.f32.gmra.mxu0 %v268
    %v349 = vpop.f32.mrf.mxu0
    %v350 = vadd.f32 %v261, %v349
    %v351 = vpop.f32.mrf.mxu0
    %352 = vdwg.mxu0
    %v353 = vtanh.pop %v340
    %v354 = vtanh.pop %v345
    %v355 = vtanh.pop %v350
    %v356 = vld [vmem:[%s4] sm:$0xf]
    %358 = vset.pattern.permute.xlu0 20
    %359 = vperm.xlu0 %358, %v356
    %v360 = vpop.permute.xlu0 %359
    %v362 = vsel %vm263, %v356, 0
    %v365 = vsel %vm54, %v355, 0
    %367 = vmatprep.subr.mxu0 0.0
    %368 = vmatpush1.msra.mxu0 0.0
    %369 = vmatprep.subr.mxu0 0.0
    %370 = vmatpush1.msra.mxu0 0.0
    %371 = vmatprep.subr.mxu0 0.0
    %372 = vmatpush1.msra.mxu0 0.0
    %373 = vmatprep.subr.mxu0 0.0
    %374 = vmatpush1.msra.mxu0 0.0
    %375 = vmatprep.subr.mxu0 0.0
    %376 = vmatpush1.msra.mxu0 0.0
    %377 = vmatprep.subr.mxu0 0.0
    %378 = vmatpush1.msra.mxu0 0.0
    %379 = vmatprep.subr.mxu0 0.0
    %380 = vmatpush1.msra.mxu0 0.0
    %381 = vmatprep.subr.mxu0 0.0
    %382 = vmatpush1.msra.mxu0 0.0
    %383 = vmatprep.subr.mxu0 0.0
    %384 = vmatpush1.msra.mxu0 0.0
    %385 = vmatprep.subr.mxu0 0.0
    %386 = vmatpush1.msra.mxu0 0.0
    %387 = vmatprep.subr.mxu0 0.0
    %388 = vmatpush1.msra.mxu0 0.0
    %389 = vmatprep.subr.mxu0 0.0
    %390 = vmatpush1.msra.mxu0 0.0
    %391 = vmatprep.subr.mxu0 0.0
    %392 = vmatpush1.msra.mxu0 0.0
    %393 = vmatprep.subr.mxu0 0.0
    %394 = vmatpush1.msra.mxu0 %v365
    %395 = vmatprep.subr.mxu0 0.0
    %396 = vmatpush1.msra.mxu0 %v354
    %397 = vmatprep.subr.mxu0 0.0
    %398 = vmatpush1.msra.mxu0 %v353
    %399 = vmatprep.subr.mxu0 0.0
    %400 = vmatpush2.msra.mxu0 0.0
    %401 = vmatprep.subr.mxu0 0.0
    %402 = vmatpush2.msra.mxu0 0.0
    %403 = vmatprep.subr.mxu0 0.0
    %404 = vmatpush2.msra.mxu0 0.0
    %405 = vmatprep.subr.mxu0 0.0
    %406 = vmatpush2.msra.mxu0 0.0
    %407 = vmatprep.subr.mxu0 0.0
    %408 = vmatpush2.msra.mxu0 0.0
    %409 = vmatprep.subr.mxu0 0.0
    %410 = vmatpush2.msra.mxu0 0.0
    %411 = vmatprep.subr.mxu0 0.0
    %412 = vmatpush2.msra.mxu0 0.0
    %413 = vmatprep.subr.mxu0 0.0
    %414 = vmatpush2.msra.mxu0 0.0
    %415 = vmatprep.subr.mxu0 0.0
    %416 = vmatpush2.msra.mxu0 0.0
    %417 = vmatprep.subr.mxu0 0.0
    %418 = vmatpush2.msra.mxu0 0.0
    %419 = vmatprep.subr.mxu0 0.0
    %420 = vmatpush2.msra.mxu0 0.0
    %421 = vmatprep.subr.mxu0 0.0
    %422 = vmatpush2.msra.mxu0 0.0
    %423 = vmatprep.subr.mxu0 0.0
    %424 = vmatpush2.msra.mxu0 0.0
    %425 = vmatprep.subr.mxu0 0.0
    %426 = vmatpush2.msra.mxu0 0.0
    %427 = vmatprep.subr.mxu0 0.0
    %428 = vmatpush2.msra.mxu0 0.0
    %429 = vmatprep.subr.mxu0 0.0
    %430 = vmatpush2.msra.mxu0 0.0
    %431 = vmatprep.mubr.f32.mxu0 0.0
    %432 = vmatmul.mubr.f32.gmra.mxu0 %v362
    %v433 = vpop.f32.mrf.mxu0
    %v434 = vadd.f32 %v360, %v433
    %v435 = vpop.f32.mrf.mxu0
    %436 = vdwg.mxu0
    %v437 = vadd.f32 %v33, %v434
    %vm438 = vcmask 158720
    %439 = vst.msk [vmem:[#allocation5] sm:$0xf] %vm438, %v437
    // Predicated region
    $region26: #{tpu_custom_call.1} parent=1 // pred_check
      _
    $region27: #{tpu_custom_call.1} parent=1 // pred_check_branch
      %441 = sbr.rel (0) target = $region29
    $region28: #{tpu_custom_call.1} parent=1 // pred_region
      %s443 = ssub.s32 64, 64
      %444 = vsyncadd [#allocation4], %s443
      %s446 = sshll.u32 [#allocation5], 4
      %s447 = int_to_ptr.vmem [resolvable:$true] %s446
      %449 = dma.vmem_to_hbm [thread:$0]  %s447, 64, %s5, [#allocation4]
    $region29: #{tpu_custom_call.1} parent=1 // pred_fallthru
      _
    // Predicated region
    $region30: #{tpu_custom_call.1} parent=1 // pred_check
      _
    $region31: #{tpu_custom_call.1} parent=1 // pred_check_branch
      %451 = sbr.rel (0) target = $region33
    $region32: #{tpu_custom_call.1} parent=1 // pred_region
      %452 = dma.done [#allocation4], 64
    $region33: #{tpu_custom_call.1} parent=1 // pred_fallthru
      _
    %453 = vsyncpa [#allocation3], 1
    %454 = vsyncpa [#allocation4], 1

</llo_original>
